<compile_context>
chip_gen: v5e
topology: v5e:2x2
jax: 0.10.0
libtpu: 0.0.40
codegen_flags: <defaults>
</compile_context>

<pallas_src>
import jax
import jax.numpy as jnp
from jax.experimental import pallas as pl
from jax.experimental.pallas import tpu as pltpu

OC = 8  # out_channels = in_dim * 8 with in_dim = 1


def time_kernel(x_ref, c_ref, o_ref):
    # x_ref block: (Bt, H, W) f32 for the current batch slab.
    x = x_ref[...]

    c_gram = c_ref[0]   # sum_o w1[o] * w2[o]
    c_row = c_ref[1]    # sum_o w1[o] * b2[o]
    c_col = c_ref[2]    # sum_o b1[o] * w2[o]
    c_const = c_ref[3]  # W * sum_o b1[o] * b2[o]
    gamma = c_ref[4]

    # Batched Gram matrix: contract the last axis of x with itself, no explicit .T.
    gram = jnp.einsum('bik,bjk->bij', x, x,
                      preferred_element_type=jnp.float32)          # (Bt, H, H)

    # rowsum(x)[b, i], broadcast over j (lane-reduce, keeps H on sublanes).
    rsum_i = jnp.sum(x, axis=-1, keepdims=True)                    # (Bt, H, 1)

    # rowsum(x)[b, j], broadcast over i: produced on the (idle) MXU instead of a
    # lane<->sublane transpose on the XLU.
    col_s = jnp.einsum('bik,bjk->bij', jnp.ones_like(x), x,
                       preferred_element_type=jnp.float32)         # (Bt, H, H)

    energy = c_gram * gram + c_row * rsum_i + c_col * col_s + c_const

    # Per-row min/max normalization (dim=2 in the torch code == last axis here).
    e_max = jnp.max(energy, axis=-1, keepdims=True)
    e_min = jnp.min(energy, axis=-1, keepdims=True)
    inv_rng = pl.reciprocal(e_max - e_min + 1e-8, approx=False)    # exact; approx=True on v5e if tolerable
    energy = (energy - e_min) * inv_rng

    # Softmax along the last axis.
    m = jnp.max(energy, axis=-1, keepdims=True)
    p = jnp.exp(energy - m)
    inv_den = pl.reciprocal(jnp.sum(p, axis=-1, keepdims=True), approx=False)
    attn = p * inv_den                                             # (Bt, H, H)

    # out = attention @ x  -> (Bt, H, W);  out = gamma * out + x
    out = jnp.einsum('bij,bjw->biw', attn, x,
                     preferred_element_type=jnp.float32)
    o_ref[...] = gamma * out + x


def _pick_block_b(B, target):
    """Largest divisor of B that is <= target (keeps the grid exact)."""
    bt = max(1, min(B, target))
    while B % bt:
        bt -= 1
    return bt


def time_module_forward(x, w1, b1, w2, b2, gamma, *, block_b=64):
    """x: (B, 1, H, W) NCHW.  w1/b1, w2/b2: conv1/conv2 scale+bias (flattened to (8,)).
    Returns (B, 1, H, W)."""
    B, C, H, W = x.shape
    assert C == 1, "Time_Module's reshapes require in_dim == 1"
    xf = x.reshape(B, H, W).astype(jnp.float32)

    w1 = w1.reshape(-1).astype(jnp.float32)
    b1 = b1.reshape(-1).astype(jnp.float32)
    w2 = w2.reshape(-1).astype(jnp.float32)
    b2 = b2.reshape(-1).astype(jnp.float32)

    # Precomputed scalar contractions of the 1x1-conv parameters (review item):
    coeffs = jnp.stack([
        jnp.sum(w1 * w2),            # multiplies (x x^T)[i, j]
        jnp.sum(w1 * b2),            # multiplies rowsum(x)[i]
        jnp.sum(b1 * w2),            # multiplies rowsum(x)[j]
        W * jnp.sum(b1 * b2),        # constant offset
        gamma.reshape(()),           # residual gate
    ]).astype(jnp.float32)           # (5,) -> SMEM

    bt = _pick_block_b(B, block_b)
    grid = (B // bt,)

    out = pl.pallas_call(
        time_kernel,
        out_shape=jax.ShapeDtypeStruct((B, H, W), jnp.float32),
        grid=grid,
        in_specs=[
            pl.BlockSpec((bt, H, W), lambda b: (b, 0, 0)),
            pl.BlockSpec(memory_space=pltpu.SMEM),   # coeffs (5,)
        ],
        out_specs=pl.BlockSpec((bt, H, W), lambda b: (b, 0, 0)),
        compiler_params=pltpu.CompilerParams(
            dimension_semantics=("parallel",),       # batch axis is independent -> v7x megacore
        ),
    )(xf, coeffs)

    return out.reshape(B, 1, H, W)


def ref_forward(x, w1, b1, w2, b2, gamma):
    """Pure-JAX mirror of the PyTorch forward (ground truth for verification)."""
    B, C, H, W = x.shape
    w1 = w1.reshape(-1); b1 = b1.reshape(-1)
    w2 = w2.reshape(-1); b2 = b2.reshape(-1)
    c1 = x * w1[None, :, None, None] + b1[None, :, None, None]  # (B, 8, H, W)
    c2 = x * w2[None, :, None, None] + b2[None, :, None, None]  # (B, 8, H, W)
    q = jnp.transpose(c1, (0, 2, 1, 3)).reshape(B, H, OC * W)
    k = jnp.transpose(c2, (0, 1, 3, 2)).reshape(B, OC * W, H)
    energy = jnp.einsum('bik,bkj->bij', q, k)
    mx = energy.max(axis=2, keepdims=True)
    mn = energy.min(axis=2, keepdims=True)
    energy = (energy - mn) / (mx - mn + 1e-8)
    attn = jax.nn.softmax(energy, axis=2).reshape(B, 1, H, H)
    out = jnp.einsum('bcij,bcjw->bciw', attn, x)
    return gamma * out + x


if __name__ == "__main__":
    key = jax.random.PRNGKey(0)
    kx, k1, kb1, k2, kb2, kx2 = jax.random.split(key, 6)

    B, C, H, W = 2, 1, 16, 16  # in_dim = 1 (required by the module's reshapes)
    x = jax.random.normal(kx, (B, C, H, W), dtype=jnp.float32)

    # Conv2d(1, 8, kernel_size=1) weights -> effectively (8,) scale + (8,) bias.
    w1 = jax.random.normal(k1, (OC,), dtype=jnp.float32) * 0.5
    b1 = jax.random.normal(kb1, (OC,), dtype=jnp.float32) * 0.1
    w2 = jax.random.normal(k2, (OC,), dtype=jnp.float32) * 0.5
    b2 = jax.random.normal(kb2, (OC,), dtype=jnp.float32) * 0.1
    # PyTorch init is gamma = 0 (identity residual); use a nonzero value so the
    # attention path is actually exercised numerically.
    gamma = jnp.array([0.5], dtype=jnp.float32)

    out = jax.block_until_ready(time_module_forward(x, w1, b1, w2, b2, gamma))
    ref = ref_forward(x, w1, b1, w2, b2, gamma)
    assert out.shape == (B, C, H, W)
    assert jnp.allclose(out, ref, atol=1e-4, rtol=1e-4), "mismatch vs JAX reference (B=2)"

    # Larger batch with a multi-step grid to exercise the batched block path.
    B2 = 32
    x2 = jax.random.normal(kx2, (B2, 1, H, W), dtype=jnp.float32)
    out2 = jax.block_until_ready(
        time_module_forward(x2, w1, b1, w2, b2, gamma, block_b=8))  # grid = (4,)
    ref2 = ref_forward(x2, w1, b1, w2, b2, gamma)
    assert out2.shape == (B2, 1, H, W)
    assert jnp.allclose(out2, ref2, atol=1e-4, rtol=1e-4), "mismatch vs JAX reference (B=32)"

    print("KERNEL_OK")
</pallas_src>

<mosaic_0001>
module attributes {stable_mosaic.version = 11 : i64} {
  func.func @time_kernel(%arg0: i32, %arg1: memref<2x16x16xf32, #tpu.memory_space<vmem>>, %arg2: memref<5xf32, #tpu.memory_space<smem>>, %arg3: memref<2x16x16xf32, #tpu.memory_space<vmem>>) attributes {dimension_semantics = [#tpu.dimension_semantics<parallel>], iteration_bounds = array<i64: 1>, scalar_prefetch = 0 : i64, scratch_operands = 0 : i64, tpu.core_type = #tpu.core_type<tc>, window_params = [{transform_indices = @transform_0, window_bounds = array<i64: 2, 16, 16>}, {transform_indices = @transform_1, window_bounds = array<i64: 5>}, {transform_indices = @transform_2, window_bounds = array<i64: 2, 16, 16>}]} {
    %c0 = arith.constant 0 : index
    %c0_0 = arith.constant 0 : index
    %c0_1 = arith.constant 0 : index
    %0 = vector.load %arg1[%c0, %c0_0, %c0_1] : memref<2x16x16xf32, #tpu.memory_space<vmem>>, vector<2x16x16xf32>
    %c0_2 = arith.constant 0 : index
    %1 = memref.load %arg2[%c0_2] : memref<5xf32, #tpu.memory_space<smem>>
    %c1 = arith.constant 1 : index
    %2 = memref.load %arg2[%c1] : memref<5xf32, #tpu.memory_space<smem>>
    %c2 = arith.constant 2 : index
    %3 = memref.load %arg2[%c2] : memref<5xf32, #tpu.memory_space<smem>>
    %c3 = arith.constant 3 : index
    %4 = memref.load %arg2[%c3] : memref<5xf32, #tpu.memory_space<smem>>
    %c4 = arith.constant 4 : index
    %5 = memref.load %arg2[%c4] : memref<5xf32, #tpu.memory_space<smem>>
    "tpu.trace_start"() <{level = 10 : i32, message = "bik,bjk->bij"}> : () -> ()
    %cst = arith.constant dense<0.000000e+00> : vector<2x16x16xf32>
    %6 = tpu.matmul %0, %0, %cst {dimension_numbers = #tpu.dot_dimension_numbers<[2], [2], [1], [1], [0, 0, 0, 1, 1, 1], [0], [0]>} : vector<2x16x16xf32>, vector<2x16x16xf32>, vector<2x16x16xf32> -> vector<2x16x16xf32>
    "tpu.trace_stop"() : () -> ()
    %cst_3 = arith.constant dense<0.000000e+00> : vector<2x16xf32>
    %7 = vector.multi_reduction <add>, %0, %cst_3 [2] : vector<2x16x16xf32> to vector<2x16xf32>
    %8 = vector.shape_cast %7 : vector<2x16xf32> to vector<2x16x1xf32>
    %cst_4 = arith.constant 1.000000e+00 : f32
    %9 = vector.broadcast %cst_4 : f32 to vector<2x16x16xf32>
    "tpu.trace_start"() <{level = 10 : i32, message = "bik,bjk->bij"}> : () -> ()
    %cst_5 = arith.constant dense<0.000000e+00> : vector<2x16x16xf32>
    %10 = tpu.matmul %9, %0, %cst_5 {dimension_numbers = #tpu.dot_dimension_numbers<[2], [2], [1], [1], [0, 0, 0, 1, 1, 1], [0], [0]>} : vector<2x16x16xf32>, vector<2x16x16xf32>, vector<2x16x16xf32> -> vector<2x16x16xf32>
    "tpu.trace_stop"() : () -> ()
    %11 = vector.broadcast %1 : f32 to vector<2x16x16xf32>
    %12 = arith.mulf %11, %6 : vector<2x16x16xf32>
    %13 = vector.broadcast %2 : f32 to vector<2x16x1xf32>
    %14 = arith.mulf %13, %8 : vector<2x16x1xf32>
    %15 = vector.broadcast %14 : vector<2x16x1xf32> to vector<2x16x16xf32>
    %16 = arith.addf %12, %15 : vector<2x16x16xf32>
    %17 = vector.broadcast %3 : f32 to vector<2x16x16xf32>
    %18 = arith.mulf %17, %10 : vector<2x16x16xf32>
    %19 = arith.addf %16, %18 : vector<2x16x16xf32>
    %20 = vector.broadcast %4 : f32 to vector<2x16x16xf32>
    %21 = arith.addf %19, %20 : vector<2x16x16xf32>
    %cst_6 = arith.constant dense<0xFF800000> : vector<2x16xf32>
    %22 = vector.multi_reduction <maximumf>, %21, %cst_6 [2] : vector<2x16x16xf32> to vector<2x16xf32>
    %23 = vector.shape_cast %22 : vector<2x16xf32> to vector<2x16x1xf32>
    %cst_7 = arith.constant dense<0x7F800000> : vector<2x16xf32>
    %24 = vector.multi_reduction <minimumf>, %21, %cst_7 [2] : vector<2x16x16xf32> to vector<2x16xf32>
    %25 = vector.shape_cast %24 : vector<2x16xf32> to vector<2x16x1xf32>
    %26 = arith.subf %23, %25 : vector<2x16x1xf32>
    %cst_8 = arith.constant 9.99999993E-9 : f32
    %27 = vector.broadcast %cst_8 : f32 to vector<2x16x1xf32>
    %28 = arith.addf %26, %27 : vector<2x16x1xf32>
    %29 = tpu.reciprocal %28 : vector<2x16x1xf32> -> vector<2x16x1xf32>
    %30 = vector.broadcast %25 : vector<2x16x1xf32> to vector<2x16x16xf32>
    %31 = arith.subf %21, %30 : vector<2x16x16xf32>
    %32 = vector.broadcast %29 : vector<2x16x1xf32> to vector<2x16x16xf32>
    %33 = arith.mulf %31, %32 : vector<2x16x16xf32>
    %cst_9 = arith.constant dense<0xFF800000> : vector<2x16xf32>
    %34 = vector.multi_reduction <maximumf>, %33, %cst_9 [2] : vector<2x16x16xf32> to vector<2x16xf32>
    %35 = vector.shape_cast %34 : vector<2x16xf32> to vector<2x16x1xf32>
    %36 = vector.broadcast %35 : vector<2x16x1xf32> to vector<2x16x16xf32>
    %37 = arith.subf %33, %36 : vector<2x16x16xf32>
    %38 = math.exp %37 : vector<2x16x16xf32>
    %cst_10 = arith.constant dense<0.000000e+00> : vector<2x16xf32>
    %39 = vector.multi_reduction <add>, %38, %cst_10 [2] : vector<2x16x16xf32> to vector<2x16xf32>
    %40 = vector.shape_cast %39 : vector<2x16xf32> to vector<2x16x1xf32>
    %41 = tpu.reciprocal %40 : vector<2x16x1xf32> -> vector<2x16x1xf32>
    %42 = vector.broadcast %41 : vector<2x16x1xf32> to vector<2x16x16xf32>
    %43 = arith.mulf %38, %42 : vector<2x16x16xf32>
    "tpu.trace_start"() <{level = 10 : i32, message = "bij,bjw->biw"}> : () -> ()
    %cst_11 = arith.constant dense<0.000000e+00> : vector<2x16x16xf32>
    %44 = tpu.matmul %43, %0, %cst_11 {dimension_numbers = #tpu.dot_dimension_numbers<[2], [1], [1], [2], [0, 0, 0, 1, 1, 2], [0], [0]>} : vector<2x16x16xf32>, vector<2x16x16xf32>, vector<2x16x16xf32> -> vector<2x16x16xf32>
    "tpu.trace_stop"() : () -> ()
    %45 = vector.broadcast %5 : f32 to vector<2x16x16xf32>
    %46 = arith.mulf %45, %44 : vector<2x16x16xf32>
    %47 = arith.addf %46, %0 : vector<2x16x16xf32>
    %c0_12 = arith.constant 0 : index
    %c0_13 = arith.constant 0 : index
    %c0_14 = arith.constant 0 : index
    %48 = vector.load %arg3[%c0_12, %c0_13, %c0_14] : memref<2x16x16xf32, #tpu.memory_space<vmem>>, vector<2x16x16xf32>
    tpu.vector_store %arg3[%c0_12, %c0_13, %c0_14], %47 {strides = array<i32>} : memref<2x16x16xf32, #tpu.memory_space<vmem>>, vector<2x16x16xf32>,
    return
  }
  func.func @transform_0(%arg0: i32) -> (i32, i32, i32) {
    %c0_i32 = arith.constant 0 : i32
    %c0_i32_0 = arith.constant 0 : i32
    %c0_i32_1 = arith.constant 0 : i32
    return %arg0, %c0_i32, %c0_i32_0 : i32, i32, i32
  }
  func.func @transform_1(%arg0: i32) -> i32 {
    %c0_i32 = arith.constant 0 : i32
    %c0_i32_0 = arith.constant 0 : i32
    return %c0_i32 : i32
  }
  func.func @transform_2(%arg0: i32) -> (i32, i32, i32) {
    %c0_i32 = arith.constant 0 : i32
    %c0_i32_0 = arith.constant 0 : i32
    %c0_i32_1 = arith.constant 0 : i32
    return %arg0, %c0_i32, %c0_i32_0 : i32, i32, i32
  }
}

</mosaic_0001>

<llo_original>
// kernel: tpu_custom_call.1
$region0: #{tpu_custom_call.1}
  #allocation0 [shape = 'u32[]', space=smem, size = 0x4, offset = 0x4, fixed_abs, tag = 'smem constant byte address 0x4 - core index']
  #allocation1 [shape = 'u32[72,128]{1,0:T(1,128)}', space=vmem, size = 0x9000, scoped, tag = 'internal scratch']
  %s0 = inlined_call_operand.hbm [shape: f32[2,16,16], index: 0, kind: input, shape index: {}]
  %s1 = inlined_call_operand.hbm [shape: f32[5], index: 1, kind: input, shape index: {}]
  %s2 = inlined_call_operand.hbm [shape: f32[2,16,16], index: 2, kind: output, shape index: {}]
  %s3 = sld [smem:[#allocation0]]
  $region26: #{tpu_custom_call.1} parent=0
    _
  %s5 = ssub.s32 1, %s3
  %s6 = scalar_select 0, %s5, %s3
  $region1: #{tpu_custom_call.1} parent=0
    #allocation2 [shape = 'u8[16384]{0}', space=vmem, size = 0x4000, scoped, tag = 'input window, operand 0, single buffered']
    #allocation3 [shape = 's32[1]{0}', space=sflag, size = 0x4, scoped, tag = 'scoped memory for tpu_custom_call.1']
    #allocation4 [shape = 's32[1]{0}', space=sflag, size = 0x4, scoped, tag = 'scoped memory for tpu_custom_call.1']
    #allocation5 [shape = 's32[1]{0}', space=sflag, size = 0x4, scoped, tag = 'scoped memory for tpu_custom_call.1']
    #allocation6 [shape = 'u8[512]{0}', space=smem, size = 0x200, scoped, tag = 'input window, operand 1, single buffered']
    #allocation7 [shape = 'u8[16384]{0}', space=vmem, size = 0x4000, scoped, tag = 'output window, operand 0, single buffered']
    %7 = vsyncpa [#allocation3], 0
    %8 = vsyncpa [#allocation5], 0
    %9 = vsyncpa [#allocation4], 0
    // Predicated region
    $region2: #{tpu_custom_call.1} parent=1 // pred_check
      _
    $region3: #{tpu_custom_call.1} parent=1 // pred_check_branch
      %11 = sbr.rel (0) target = $region5
    $region4: #{tpu_custom_call.1} parent=1 // pred_region
      %13 = vsyncadd [#allocation3], 0
      %s14 = sshll.u32 %s0, 4
      %s15 = int_to_ptr.hbm [resolvable:$true] %s14
      %s16 = sshll.u32 [#allocation2], 4
      %s17 = int_to_ptr.vmem [resolvable:$true] %s16
      %22 = dma.hbm_to_vmem [thread:$0]  %s15, 512, %s17, [#allocation3], 128, 128, 8
    $region5: #{tpu_custom_call.1} parent=1 // pred_fallthru
      _
    // Predicated region
    $region6: #{tpu_custom_call.1} parent=1 // pred_check
      _
    $region7: #{tpu_custom_call.1} parent=1 // pred_check_branch
      %24 = sbr.rel (0) target = $region9
    $region8: #{tpu_custom_call.1} parent=1 // pred_region
      %26 = vsyncadd [#allocation5], 0
      %s28 = sshll.u32 %s1, 4
      %s29 = int_to_ptr.hbm [resolvable:$true] %s28
      %31 = dma.hbm_to_smem %s29, 16, [#allocation6], [#allocation5]
    $region9: #{tpu_custom_call.1} parent=1 // pred_fallthru
      _
    // Predicated region
    $region10: #{tpu_custom_call.1} parent=1 // pred_check
      _
    $region11: #{tpu_custom_call.1} parent=1 // pred_check_branch
      %33 = sbr.rel (0) target = $region13
    $region12: #{tpu_custom_call.1} parent=1 // pred_region
      %35 = dma.done [#allocation3], 512
    $region13: #{tpu_custom_call.1} parent=1 // pred_fallthru
      _
    // Predicated region
    $region14: #{tpu_custom_call.1} parent=1 // pred_check
      _
    $region15: #{tpu_custom_call.1} parent=1 // pred_check_branch
      %37 = sbr.rel (0) target = $region17
    $region16: #{tpu_custom_call.1} parent=1 // pred_region
      %39 = dma.done [#allocation5], 16
    $region17: #{tpu_custom_call.1} parent=1 // pred_fallthru
      _
    %40 = sfence
    %v41 = vld [vmem:[#allocation2] sm:$0xff]
    %v42 = vld [vmem:[#allocation2 + $0x8] sm:$0xff]
    %v43 = vld [vmem:[#allocation2 + $0x10] sm:$0xff]
    %v44 = vld [vmem:[#allocation2 + $0x18] sm:$0xff]
    %s45 = sld [smem:[#allocation6]]
    %s46 = sld [smem:[#allocation6 + $0x1]]
    %s47 = sld [smem:[#allocation6 + $0x2]]
    %s48 = sld [smem:[#allocation6 + $0x3]]
    %s49 = sld [smem:[#allocation6 + $0x4]]
    %vm50 = vcmask 130048
    %v52 = vsel %vm50, %v41, 0
    %v55 = vsel %vm50, %v42, 0
    %57 = vmatpush.xpose.msra.mxu0 0.0
    %58 = vmatpush.xpose.msra.mxu0 0.0
    %59 = vmatpush.xpose.msra.mxu0 0.0
    %60 = vmatpush.xpose.msra.mxu0 0.0
    %61 = vmatpush.xpose.msra.mxu0 0.0
    %62 = vmatpush.xpose.msra.mxu0 0.0
    %63 = vmatpush.xpose.msra.mxu0 0.0
    %64 = vmatpush.xpose.msra.mxu0 0.0
    %65 = vmatpush.xpose.msra.mxu0 0.0
    %66 = vmatpush.xpose.msra.mxu0 0.0
    %67 = vmatpush.xpose.msra.mxu0 0.0
    %68 = vmatpush.xpose.msra.mxu0 0.0
    %69 = vmatpush.xpose.msra.mxu0 0.0
    %70 = vmatpush.xpose.msra.mxu0 0.0
    %71 = vmatpush.xpose.msra.mxu0 %v55
    %72 = vmatpush.xpose.msra.mxu0 %v52
    %73 = vmatmul.f32.gmra.mxu0 %v52
    %v74 = vpop.f32.mrf.mxu0
    %v75 = vadd.f32 0.0, %v74
    %76 = vmatmul.f32.gmra.mxu0 %v55
    %v77 = vpop.f32.mrf.mxu0
    %v78 = vadd.f32 0.0, %v77
    %79 = vdwg.mxu0
    %v81 = vsel %vm50, %v43, 0
    %v84 = vsel %vm50, %v44, 0
    %86 = vmatpush.xpose.msra.mxu0 0.0
    %87 = vmatpush.xpose.msra.mxu0 0.0
    %88 = vmatpush.xpose.msra.mxu0 0.0
    %89 = vmatpush.xpose.msra.mxu0 0.0
    %90 = vmatpush.xpose.msra.mxu0 0.0
    %91 = vmatpush.xpose.msra.mxu0 0.0
    %92 = vmatpush.xpose.msra.mxu0 0.0
    %93 = vmatpush.xpose.msra.mxu0 0.0
    %94 = vmatpush.xpose.msra.mxu0 0.0
    %95 = vmatpush.xpose.msra.mxu0 0.0
    %96 = vmatpush.xpose.msra.mxu0 0.0
    %97 = vmatpush.xpose.msra.mxu0 0.0
    %98 = vmatpush.xpose.msra.mxu0 0.0
    %99 = vmatpush.xpose.msra.mxu0 0.0
    %100 = vmatpush.xpose.msra.mxu0 %v84
    %101 = vmatpush.xpose.msra.mxu0 %v81
    %102 = vmatmul.f32.gmra.mxu0 %v81
    %v103 = vpop.f32.mrf.mxu0
    %v104 = vadd.f32 0.0, %v103
    %105 = vmatmul.f32.gmra.mxu0 %v84
    %v106 = vpop.f32.mrf.mxu0
    %v107 = vadd.f32 0.0, %v106
    %108 = vdwg.mxu0
    %v109 = vsel %vm50, %v41, 0.0
    %110 = vadd.xlane.f32.xlu0 %v109
    %v111 = vpop.xlane.xlu0 %110
    %v112 = vsel %vm50, %v42, 0.0
    %113 = vadd.xlane.f32.xlu0 %v112
    %v114 = vpop.xlane.xlu0 %113
    %v115 = vsel %vm50, %v43, 0.0
    %116 = vadd.xlane.f32.xlu0 %v115
    %v117 = vpop.xlane.xlu0 %116
    %v118 = vsel %vm50, %v44, 0.0
    %119 = vadd.xlane.f32.xlu0 %v118
    %v120 = vpop.xlane.xlu0 %119
    %v122 = vsel %vm50, 1.0, 0
    %124 = vmatpush.xpose.msra.mxu0 0.0
    %125 = vmatpush.xpose.msra.mxu0 0.0
    %126 = vmatpush.xpose.msra.mxu0 0.0
    %127 = vmatpush.xpose.msra.mxu0 0.0
    %128 = vmatpush.xpose.msra.mxu0 0.0
    %129 = vmatpush.xpose.msra.mxu0 0.0
    %130 = vmatpush.xpose.msra.mxu0 0.0
    %131 = vmatpush.xpose.msra.mxu0 0.0
    %132 = vmatpush.xpose.msra.mxu0 0.0
    %133 = vmatpush.xpose.msra.mxu0 0.0
    %134 = vmatpush.xpose.msra.mxu0 0.0
    %135 = vmatpush.xpose.msra.mxu0 0.0
    %136 = vmatpush.xpose.msra.mxu0 0.0
    %137 = vmatpush.xpose.msra.mxu0 0.0
    %138 = vmatpush.xpose.msra.mxu0 %v55
    %139 = vmatpush.xpose.msra.mxu0 %v52
    %140 = vmatmul.f32.gmra.mxu0 %v122
    %v141 = vpop.f32.mrf.mxu0
    %v142 = vadd.f32 0.0, %v141
    %143 = vmatmul.f32.gmra.mxu0 %v122
    %v144 = vpop.f32.mrf.mxu0
    %v145 = vadd.f32 0.0, %v144
    %146 = vdwg.mxu0
    %147 = vmatpush.xpose.msra.mxu0 0.0
    %148 = vmatpush.xpose.msra.mxu0 0.0
    %149 = vmatpush.xpose.msra.mxu0 0.0
    %150 = vmatpush.xpose.msra.mxu0 0.0
    %151 = vmatpush.xpose.msra.mxu0 0.0
    %152 = vmatpush.xpose.msra.mxu0 0.0
    %153 = vmatpush.xpose.msra.mxu0 0.0
    %154 = vmatpush.xpose.msra.mxu0 0.0
    %155 = vmatpush.xpose.msra.mxu0 0.0
    %156 = vmatpush.xpose.msra.mxu0 0.0
    %157 = vmatpush.xpose.msra.mxu0 0.0
    %158 = vmatpush.xpose.msra.mxu0 0.0
    %159 = vmatpush.xpose.msra.mxu0 0.0
    %160 = vmatpush.xpose.msra.mxu0 0.0
    %161 = vmatpush.xpose.msra.mxu0 %v84
    %162 = vmatpush.xpose.msra.mxu0 %v81
    %163 = vmatmul.f32.gmra.mxu0 %v122
    %v164 = vpop.f32.mrf.mxu0
    %v165 = vadd.f32 0.0, %v164
    %166 = vmatmul.f32.gmra.mxu0 %v122
    %v167 = vpop.f32.mrf.mxu0
    %v168 = vadd.f32 0.0, %v167
    %169 = vdwg.mxu0
    %v170 = vstv %s45
    %v171 = vmul.f32 %v170, %v75
    %v172 = vmul.f32 %v170, %v78
    %v173 = vmul.f32 %v170, %v104
    %v174 = vmul.f32 %v170, %v107
    %v175 = vstv %s46
    %v176 = vmul.f32 %v175, %v111
    %v177 = vmul.f32 %v175, %v114
    %v178 = vmul.f32 %v175, %v117
    %v179 = vmul.f32 %v175, %v120
    %v180 = vadd.f32 %v171, %v176
    %v181 = vadd.f32 %v172, %v177
    %v182 = vadd.f32 %v173, %v178
    %v183 = vadd.f32 %v174, %v179
    %v184 = vstv %s47
    %v185 = vmul.f32 %v184, %v142
    %v186 = vmul.f32 %v184, %v145
    %v187 = vmul.f32 %v184, %v165
    %v188 = vmul.f32 %v184, %v168
    %v189 = vadd.f32 %v180, %v185
    %v190 = vadd.f32 %v181, %v186
    %v191 = vadd.f32 %v182, %v187
    %v192 = vadd.f32 %v183, %v188
    %v193 = vstv %s48
    %v194 = vadd.f32 %v189, %v193
    %v195 = vadd.f32 %v190, %v193
    %v196 = vadd.f32 %v191, %v193
    %v197 = vadd.f32 %v192, %v193
    %v198 = vsel %vm50, %v194, -inf
    %199 = vmax.xlane.f32.xlu0 %v198
    %v200 = vpop.xlane.xlu0 %199
    %v201 = vsel %vm50, %v195, -inf
    %202 = vmax.xlane.f32.xlu0 %v201
    %v203 = vpop.xlane.xlu0 %202
    %v204 = vsel %vm50, %v196, -inf
    %205 = vmax.xlane.f32.xlu0 %v204
    %v206 = vpop.xlane.xlu0 %205
    %v207 = vsel %vm50, %v197, -inf
    %208 = vmax.xlane.f32.xlu0 %v207
    %v209 = vpop.xlane.xlu0 %208
    %v210 = vsel %vm50, %v194, inf
    %211 = vmin.xlane.f32.xlu0 %v210
    %v212 = vpop.xlane.xlu0 %211
    %v213 = vsel %vm50, %v195, inf
    %214 = vmin.xlane.f32.xlu0 %v213
    %v215 = vpop.xlane.xlu0 %214
    %v216 = vsel %vm50, %v196, inf
    %217 = vmin.xlane.f32.xlu0 %v216
    %v218 = vpop.xlane.xlu0 %217
    %v219 = vsel %vm50, %v197, inf
    %220 = vmin.xlane.f32.xlu0 %v219
    %v221 = vpop.xlane.xlu0 %220
    %v222 = vsub.f32 %v200, %v212
    %v223 = vsub.f32 %v203, %v215
    %v224 = vsub.f32 %v206, %v218
    %v225 = vsub.f32 %v209, %v221
    %v226 = vadd.f32 %v222, 1e-08
    %v227 = vadd.f32 %v223, 1e-08
    %v228 = vadd.f32 %v224, 1e-08
    %v229 = vadd.f32 %v225, 1e-08
    %v230 = vrcp.pop %v226
    %v231 = vmul.f32 %v226, %v230
    %v232 = vsub.f32 1.0, %v231
    %v233 = vmul.f32 %v230, %v232
    %v234 = vadd.f32 %v230, %v233
    %vm235 = vweird.f32 %v226
    %vm236 = vweird.f32 %v230
    %vm237 = vmor %vm235, %vm236
    %v238 = vsel %vm237, %v230, %v234
    %v239 = vand.u32 2147483647, %v226
    %vm240 = vcmp.eq.f32.partialorder %v239, 8.507059e+37
    %v241 = vand.u32 %v226, 2147483648
    %v242 = vor.u32 1.1754944e-38, %v241
    %v243 = vsel %vm240, %v242, %v238
    %v244 = vrcp.pop %v227
    %v245 = vmul.f32 %v227, %v244
    %v246 = vsub.f32 1.0, %v245
    %v247 = vmul.f32 %v244, %v246
    %v248 = vadd.f32 %v244, %v247
    %vm249 = vweird.f32 %v227
    %vm250 = vweird.f32 %v244
    %vm251 = vmor %vm249, %vm250
    %v252 = vsel %vm251, %v244, %v248
    %v253 = vand.u32 2147483647, %v227
    %vm254 = vcmp.eq.f32.partialorder %v253, 8.507059e+37
    %v255 = vand.u32 %v227, 2147483648
    %v256 = vor.u32 1.1754944e-38, %v255
    %v257 = vsel %vm254, %v256, %v252
    %v258 = vrcp.pop %v228
    %v259 = vmul.f32 %v228, %v258
    %v260 = vsub.f32 1.0, %v259
    %v261 = vmul.f32 %v258, %v260
    %v262 = vadd.f32 %v258, %v261
    %vm263 = vweird.f32 %v228
    %vm264 = vweird.f32 %v258
    %vm265 = vmor %vm263, %vm264
    %v266 = vsel %vm265, %v258, %v262
    %v267 = vand.u32 2147483647, %v228
    %vm268 = vcmp.eq.f32.partialorder %v267, 8.507059e+37
    %v269 = vand.u32 %v228, 2147483648
    %v270 = vor.u32 1.1754944e-38, %v269
    %v271 = vsel %vm268, %v270, %v266
    %v272 = vrcp.pop %v229
    %v273 = vmul.f32 %v229, %v272
    %v274 = vsub.f32 1.0, %v273
    %v275 = vmul.f32 %v272, %v274
    %v276 = vadd.f32 %v272, %v275
    %vm277 = vweird.f32 %v229
    %vm278 = vweird.f32 %v272
    %vm279 = vmor %vm277, %vm278
    %v280 = vsel %vm279, %v272, %v276
    %v281 = vand.u32 2147483647, %v229
    %vm282 = vcmp.eq.f32.partialorder %v281, 8.507059e+37
    %v283 = vand.u32 %v229, 2147483648
    %v284 = vor.u32 1.1754944e-38, %v283
    %v285 = vsel %vm282, %v284, %v280
    %v286 = vsub.f32 %v194, %v212
    %v287 = vsub.f32 %v195, %v215
    %v288 = vsub.f32 %v196, %v218
    %v289 = vsub.f32 %v197, %v221
    %v290 = vmul.f32 %v286, %v243
    %v291 = vmul.f32 %v287, %v257
    %v292 = vmul.f32 %v288, %v271
    %v293 = vmul.f32 %v289, %v285
    %v294 = vsel %vm50, %v290, -inf
    %295 = vmax.xlane.f32.xlu0 %v294
    %v296 = vpop.xlane.xlu0 %295
    %v297 = vsel %vm50, %v291, -inf
    %298 = vmax.xlane.f32.xlu0 %v297
    %v299 = vpop.xlane.xlu0 %298
    %v300 = vsel %vm50, %v292, -inf
    %301 = vmax.xlane.f32.xlu0 %v300
    %v302 = vpop.xlane.xlu0 %301
    %v303 = vsel %vm50, %v293, -inf
    %304 = vmax.xlane.f32.xlu0 %v303
    %v305 = vpop.xlane.xlu0 %304
    %v306 = vsub.f32 %v290, %v296
    %v307 = vsub.f32 %v291, %v299
    %v308 = vsub.f32 %v292, %v302
    %v309 = vsub.f32 %v293, %v305
    %v310 = vmul.f32 %v306, 1.442695
    %v311 = vpow.pop %v310
    %v312 = vmul.f32 %v307, 1.442695
    %v313 = vpow.pop %v312
    %v314 = vmul.f32 %v308, 1.442695
    %v315 = vpow.pop %v314
    %v316 = vmul.f32 %v309, 1.442695
    %v317 = vpow.pop %v316
    %v318 = vsel %vm50, %v311, 0.0
    %319 = vadd.xlane.f32.xlu0 %v318
    %v320 = vpop.xlane.xlu0 %319
    %v321 = vsel %vm50, %v313, 0.0
    %322 = vadd.xlane.f32.xlu0 %v321
    %v323 = vpop.xlane.xlu0 %322
    %v324 = vsel %vm50, %v315, 0.0
    %325 = vadd.xlane.f32.xlu0 %v324
    %v326 = vpop.xlane.xlu0 %325
    %v327 = vsel %vm50, %v317, 0.0
    %328 = vadd.xlane.f32.xlu0 %v327
    %v329 = vpop.xlane.xlu0 %328
    %v330 = vrcp.pop %v320
    %v331 = vmul.f32 %v320, %v330
    %v332 = vsub.f32 1.0, %v331
    %v333 = vmul.f32 %v330, %v332
    %v334 = vadd.f32 %v330, %v333
    %vm335 = vweird.f32 %v320
    %vm336 = vweird.f32 %v330
    %vm337 = vmor %vm335, %vm336
    %v338 = vsel %vm337, %v330, %v334
    %v339 = vand.u32 2147483647, %v320
    %vm340 = vcmp.eq.f32.partialorder %v339, 8.507059e+37
    %v341 = vand.u32 %v320, 2147483648
    %v342 = vor.u32 1.1754944e-38, %v341
    %v343 = vsel %vm340, %v342, %v338
    %v344 = vrcp.pop %v323
    %v345 = vmul.f32 %v323, %v344
    %v346 = vsub.f32 1.0, %v345
    %v347 = vmul.f32 %v344, %v346
    %v348 = vadd.f32 %v344, %v347
    %vm349 = vweird.f32 %v323
    %vm350 = vweird.f32 %v344
    %vm351 = vmor %vm349, %vm350
    %v352 = vsel %vm351, %v344, %v348
    %v353 = vand.u32 2147483647, %v323
    %vm354 = vcmp.eq.f32.partialorder %v353, 8.507059e+37
    %v355 = vand.u32 %v323, 2147483648
    %v356 = vor.u32 1.1754944e-38, %v355
    %v357 = vsel %vm354, %v356, %v352
    %v358 = vrcp.pop %v326
    %v359 = vmul.f32 %v326, %v358
    %v360 = vsub.f32 1.0, %v359
    %v361 = vmul.f32 %v358, %v360
    %v362 = vadd.f32 %v358, %v361
    %vm363 = vweird.f32 %v326
    %vm364 = vweird.f32 %v358
    %vm365 = vmor %vm363, %vm364
    %v366 = vsel %vm365, %v358, %v362
    %v367 = vand.u32 2147483647, %v326
    %vm368 = vcmp.eq.f32.partialorder %v367, 8.507059e+37
    %v369 = vand.u32 %v326, 2147483648
    %v370 = vor.u32 1.1754944e-38, %v369
    %v371 = vsel %vm368, %v370, %v366
    %v372 = vrcp.pop %v329
    %v373 = vmul.f32 %v329, %v372
    %v374 = vsub.f32 1.0, %v373
    %v375 = vmul.f32 %v372, %v374
    %v376 = vadd.f32 %v372, %v375
    %vm377 = vweird.f32 %v329
    %vm378 = vweird.f32 %v372
    %vm379 = vmor %vm377, %vm378
    %v380 = vsel %vm379, %v372, %v376
    %v381 = vand.u32 2147483647, %v329
    %vm382 = vcmp.eq.f32.partialorder %v381, 8.507059e+37
    %v383 = vand.u32 %v329, 2147483648
    %v384 = vor.u32 1.1754944e-38, %v383
    %v385 = vsel %vm382, %v384, %v380
    %v386 = vmul.f32 %v311, %v343
    %v387 = vmul.f32 %v313, %v357
    %v388 = vmul.f32 %v315, %v371
    %v389 = vmul.f32 %v317, %v385
    %v391 = vsel %vm50, %v386, 0
    %v394 = vsel %vm50, %v387, 0
    %396 = vmatpush.msra.mxu0 0.0
    %397 = vmatpush.msra.mxu0 0.0
    %398 = vmatpush.msra.mxu0 0.0
    %399 = vmatpush.msra.mxu0 0.0
    %400 = vmatpush.msra.mxu0 0.0
    %401 = vmatpush.msra.mxu0 0.0
    %402 = vmatpush.msra.mxu0 0.0
    %403 = vmatpush.msra.mxu0 0.0
    %404 = vmatpush.msra.mxu0 0.0
    %405 = vmatpush.msra.mxu0 0.0
    %406 = vmatpush.msra.mxu0 0.0
    %407 = vmatpush.msra.mxu0 0.0
    %408 = vmatpush.msra.mxu0 0.0
    %409 = vmatpush.msra.mxu0 0.0
    %410 = vmatpush.msra.mxu0 %v42
    %411 = vmatpush.msra.mxu0 %v41
    %412 = vmatmul.f32.gmra.mxu0 %v391
    %v413 = vpop.f32.mrf.mxu0
    %v414 = vadd.f32 0.0, %v413
    %415 = vmatmul.f32.gmra.mxu0 %v394
    %v416 = vpop.f32.mrf.mxu0
    %v417 = vadd.f32 0.0, %v416
    %418 = vdwg.mxu0
    %v420 = vsel %vm50, %v388, 0
    %v423 = vsel %vm50, %v389, 0
    %425 = vmatpush.msra.mxu0 0.0
    %426 = vmatpush.msra.mxu0 0.0
    %427 = vmatpush.msra.mxu0 0.0
    %428 = vmatpush.msra.mxu0 0.0
    %429 = vmatpush.msra.mxu0 0.0
    %430 = vmatpush.msra.mxu0 0.0
    %431 = vmatpush.msra.mxu0 0.0
    %432 = vmatpush.msra.mxu0 0.0
    %433 = vmatpush.msra.mxu0 0.0
    %434 = vmatpush.msra.mxu0 0.0
    %435 = vmatpush.msra.mxu0 0.0
    %436 = vmatpush.msra.mxu0 0.0
    %437 = vmatpush.msra.mxu0 0.0
    %438 = vmatpush.msra.mxu0 0.0
    %439 = vmatpush.msra.mxu0 %v44
    %440 = vmatpush.msra.mxu0 %v43
    %441 = vmatmul.f32.gmra.mxu0 %v420
    %v442 = vpop.f32.mrf.mxu0
    %v443 = vadd.f32 0.0, %v442
    %444 = vmatmul.f32.gmra.mxu0 %v423
    %v445 = vpop.f32.mrf.mxu0
    %v446 = vadd.f32 0.0, %v445
    %447 = vdwg.mxu0
    %v448 = vstv %s49
    %v449 = vmul.f32 %v448, %v414
    %v450 = vmul.f32 %v448, %v417
    %v451 = vmul.f32 %v448, %v443
    %v452 = vmul.f32 %v448, %v446
    %v453 = vadd.f32 %v449, %v41
    %v454 = vadd.f32 %v450, %v42
    %v455 = vadd.f32 %v451, %v43
    %v456 = vadd.f32 %v452, %v44
    %457 = vst.msk [vmem:[#allocation7] sm:$0xff] %vm50, %v453
    %458 = vst.msk [vmem:[#allocation7 + $0x8] sm:$0xff] %vm50, %v454
    %459 = vst.msk [vmem:[#allocation7 + $0x10] sm:$0xff] %vm50, %v455
    %460 = vst.msk [vmem:[#allocation7 + $0x18] sm:$0xff] %vm50, %v456
    // Predicated region
    $region18: #{tpu_custom_call.1} parent=1 // pred_check
      _
    $region19: #{tpu_custom_call.1} parent=1 // pred_check_branch
      %462 = sbr.rel (0) target = $region21
    $region20: #{tpu_custom_call.1} parent=1 // pred_region
      %464 = vsyncadd [#allocation4], 0
      %s465 = sshll.u32 [#allocation7], 4
      %s466 = int_to_ptr.vmem [resolvable:$true] %s465
      %s467 = sshll.u32 %s2, 4
      %s468 = int_to_ptr.hbm [resolvable:$true] %s467
      %473 = dma.vmem_to_hbm [thread:$0]  %s466, 512, %s468, [#allocation4], 128, 128, 8
    $region21: #{tpu_custom_call.1} parent=1 // pred_fallthru
      _
    // Predicated region
    $region22: #{tpu_custom_call.1} parent=1 // pred_check
      _
    $region23: #{tpu_custom_call.1} parent=1 // pred_check_branch
      %475 = sbr.rel (0) target = $region25
    $region24: #{tpu_custom_call.1} parent=1 // pred_region
      %477 = dma.done [#allocation4], 512
    $region25: #{tpu_custom_call.1} parent=1 // pred_fallthru
      _
    %478 = vsyncpa [#allocation3], 1
    %479 = vsyncpa [#allocation4], 1
    %480 = vsyncpa [#allocation5], 1

</llo_original>
